<compile_context>
chip_gen: v7x
topology: tpu7x:2x2x1
jax: 0.10.0
libtpu: 0.0.40
codegen_flags: <defaults>
</compile_context>

<pallas_src>
import jax
import jax.numpy as jnp
from jax.experimental import pallas as pl
from jax.experimental.pallas import tpu as pltpu


def _critic_kernel(xT_ref, w1t_ref, w2t_ref, pk_ref, b3_ref, out_ref):
    """One lane-dense batch tile of the 3-layer MLP (features on sublanes)."""
    # layer 1: (H, S+A) @ (S+A, tb) -> (H, tb)   [concat already fused]
    h = jnp.dot(w1t_ref[...], xT_ref[...], preferred_element_type=jnp.float32)
    h = jnp.maximum(h + pk_ref[:, 0:1], 0.0)                     # + b1, relu
    # layer 2: (H, H) @ (H, tb) -> (H, tb)
    h = jnp.dot(w2t_ref[...], h.astype(w2t_ref.dtype),
                preferred_element_type=jnp.float32)
    h = jnp.maximum(h + pk_ref[:, 1:2], 0.0)                     # + b2, relu
    # layer 3 (out_features == 1): weighted sublane reduction -> (1, tb);
    # lane-dense row store, b3 is a scalar read from SMEM.
    v = jnp.sum(h * pk_ref[:, 2:3], axis=0, keepdims=True) + b3_ref[0, 0]
    out_ref[...] = v.astype(out_ref.dtype)


def _num_parallel_cores():
    """TensorCores per chip that a 'parallel' grid axis can be sharded over."""
    try:
        kind = jax.devices()[0].device_kind.lower()
    except Exception:
        return 1
    # v7x has 2 TCs per chip; v4 / v5p megacore also shard "parallel" axes.
    return 2 if ("v7" in kind or "v4" in kind or "v5p" in kind) else 1


def _batch_tile(batch, block_batch, num_cores):
    """Pick the lane-dense batch tile: a multiple of 128, or the full batch."""
    block_batch = max(128, (block_batch // 128) * 128)
    if num_cores > 1 and batch >= 2 * 128:
        # Ensure >= num_cores grid steps so every TensorCore gets work.
        per_core = -(-batch // num_cores)                 # ceil(B / cores)
        per_core = -(-per_core // 128) * 128              # round up to 128
        return min(block_batch, per_core)
    if batch <= block_batch:
        return batch          # single full-batch tile (full-dim block is legal)
    return block_batch


def critic_forward(state, action, params, *, block_batch=4096,
                   compute_dtype=jnp.float32, num_cores=None):
    """state: (B, S), action: (B, A) -> value: (B, 1) float32."""
    w1t, w2t, packed, b3 = params
    B = state.shape[0]
    in_dim = w1t.shape[1]

    # Fuse the concat (and hence both layer-1 matmuls) and move batch onto
    # lanes: x^T has shape (S+A, B).  Both are tiny XLA-side reshuffles.
    xT = jnp.concatenate([state, action], axis=1).T.astype(compute_dtype)
    w1t = w1t.astype(compute_dtype)
    w2t = w2t.astype(compute_dtype)
    packed = packed.astype(jnp.float32)        # bias add / relu / w3 stay f32
    b3 = b3.astype(jnp.float32)

    if num_cores is None:
        num_cores = _num_parallel_cores()
    tb = _batch_tile(B, block_batch, num_cores)
    grid = (pl.cdiv(B, tb),)

    # Weights: same block every grid step -> VMEM-resident, DMA'd once.
    resident = lambda a: pl.BlockSpec(a.shape, lambda i: (0,) * a.ndim)

    vals_row = pl.pallas_call(
        _critic_kernel,
        out_shape=jax.ShapeDtypeStruct((1, B), jnp.float32),
        grid=grid,
        in_specs=[
            pl.BlockSpec((in_dim, tb), lambda i: (0, i)),  # x^T tile (pipelined)
            resident(w1t),                                  # (H, S+A)
            resident(w2t),                                  # (H, H)
            resident(packed),                               # (H, 3) = b1|b2|w3
            pl.BlockSpec(memory_space=pltpu.MemorySpace.SMEM),   # b3 scalar
        ],
        out_specs=pl.BlockSpec((1, tb), lambda i: (0, i)),
        compiler_params=pltpu.CompilerParams(
            dimension_semantics=("parallel",)),
    )(xT, w1t, w2t, packed, b3)
    return vals_row.reshape(B, 1)


def init_critic_params(key, state_dim, action_dim, hidden_size):
    """Xavier-uniform weights (zero biases), stored in PyTorch (out, in) layout.

    b1, b2 and the final weight row w3 are packed into one (hidden, 3) array
    (columns: b1 | b2 | w3) so the kernel needs a single resident DMA stream
    for them; b3 is a (1, 1) SMEM scalar.
    """
    def xavier(k, fan_in, fan_out):
        limit = jnp.sqrt(6.0 / (fan_in + fan_out))
        return jax.random.uniform(k, (fan_out, fan_in), jnp.float32,
                                  minval=-limit, maxval=limit)

    input_size = state_dim + action_dim
    k1, k2, k3 = jax.random.split(key, 3)
    w1t = xavier(k1, input_size, hidden_size)           # (H, S+A)
    w2t = xavier(k2, hidden_size, hidden_size)          # (H, H)
    w3 = xavier(k3, hidden_size, 1)                     # (1, H)
    packed = jnp.stack(
        [jnp.zeros((hidden_size,), jnp.float32),        # b1
         jnp.zeros((hidden_size,), jnp.float32),        # b2
         w3[0]], axis=1)                                # w3   -> (H, 3)
    b3 = jnp.zeros((1, 1), jnp.float32)
    return (w1t, w2t, packed, b3)


def _reference(state, action, params):
    """Pure-JAX reference matching the PyTorch Critic.forward semantics."""
    w1t, w2t, packed, b3 = params
    x = jnp.concatenate([state, action], axis=1)
    h = jax.nn.relu(x @ w1t.T + packed[:, 0])
    h = jax.nn.relu(h @ w2t.T + packed[:, 1])
    return h @ packed[:, 2:3] + b3[0, 0]


if __name__ == "__main__":
    state_dim, action_dim, hidden_size = 6, 2, 32

    key = jax.random.PRNGKey(0)
    k_s, k_a, k_p = jax.random.split(key, 3)
    params = init_critic_params(k_p, state_dim, action_dim, hidden_size)

    # Case 1: tiny batch -> single full-batch lane tile.
    b = 2
    s = jax.random.normal(k_s, (b, state_dim), jnp.float32)
    a = jax.random.normal(k_a, (b, action_dim), jnp.float32)
    out = jax.block_until_ready(critic_forward(s, a, params))
    ref = _reference(s, a, params)
    assert out.shape == (b, 1), out.shape
    assert jnp.allclose(out, ref, atol=1e-5, rtol=1e-5)

    # Case 2: multi-step "parallel" batch grid with a partial tail tile
    # (tb = 128 lanes, resident weights reused across 5 steps).
    b = 600
    s = jax.random.normal(k_s, (b, state_dim), jnp.float32)
    a = jax.random.normal(k_a, (b, action_dim), jnp.float32)
    out = jax.block_until_ready(
        critic_forward(s, a, params, block_batch=128, num_cores=1))
    ref = _reference(s, a, params)
    assert out.shape == (b, 1), out.shape
    assert jnp.allclose(out, ref, atol=1e-5, rtol=1e-5)

    # Case 3: the >= 2-grid-step split used on multi-TensorCore chips (v7x).
    out = jax.block_until_ready(critic_forward(s, a, params, num_cores=2))
    assert jnp.allclose(out, ref, atol=1e-5, rtol=1e-5)

    # Case 4: bf16 inputs/weights (f32 accumulation, bias add and relu).
    b = 256
    s = jax.random.normal(k_s, (b, state_dim), jnp.float32)
    a = jax.random.normal(k_a, (b, action_dim), jnp.float32)
    out = jax.block_until_ready(
        critic_forward(s, a, params, compute_dtype=jnp.bfloat16))
    ref = _reference(s, a, params)
    assert out.shape == (b, 1), out.shape
    assert jnp.allclose(out, ref, atol=5e-2, rtol=5e-2)

    print("KERNEL_OK")
</pallas_src>

<mosaic_0001>
module attributes {stable_mosaic.version = 11 : i64} {
  func.func @_critic_kernel(%arg0: i32, %arg1: memref<8x2xf32, #tpu.memory_space<vmem>>, %arg2: memref<32x8xf32, #tpu.memory_space<vmem>>, %arg3: memref<32x32xf32, #tpu.memory_space<vmem>>, %arg4: memref<32x3xf32, #tpu.memory_space<vmem>>, %arg5: memref<1x1xf32, #tpu.memory_space<smem>>, %arg6: memref<1x2xf32, #tpu.memory_space<vmem>>) attributes {dimension_semantics = [#tpu.dimension_semantics<parallel>], iteration_bounds = array<i64: 1>, scalar_prefetch = 0 : i64, scratch_operands = 0 : i64, tpu.core_type = #tpu.core_type<tc>, window_params = [{transform_indices = @transform_0, window_bounds = array<i64: 8, 2>}, {pipeline_mode = #tpu.pipeline_mode<synchronous>, transform_indices = @transform_1, window_bounds = array<i64: 32, 8>}, {pipeline_mode = #tpu.pipeline_mode<synchronous>, transform_indices = @transform_2, window_bounds = array<i64: 32, 32>}, {pipeline_mode = #tpu.pipeline_mode<synchronous>, transform_indices = @transform_3, window_bounds = array<i64: 32, 3>}, {transform_indices = @transform_4, window_bounds = array<i64: 1, 1>}, {transform_indices = @transform_5, window_bounds = array<i64: 1, 2>}]} {
    %c0 = arith.constant 0 : index
    %c0_0 = arith.constant 0 : index
    %0 = vector.load %arg2[%c0, %c0_0] : memref<32x8xf32, #tpu.memory_space<vmem>>, vector<32x8xf32>
    %c0_1 = arith.constant 0 : index
    %c0_2 = arith.constant 0 : index
    %1 = vector.load %arg1[%c0_1, %c0_2] : memref<8x2xf32, #tpu.memory_space<vmem>>, vector<8x2xf32>
    %cst = arith.constant dense<0.000000e+00> : vector<32x2xf32>
    %2 = tpu.matmul %0, %1, %cst {dimension_numbers = #tpu.dot_dimension_numbers<[1], [0], [0], [1], [0, 0, 1, 1], [], []>} : vector<32x8xf32>, vector<8x2xf32>, vector<32x2xf32> -> vector<32x2xf32>
    %c0_3 = arith.constant 0 : index
    %c0_4 = arith.constant 0 : index
    %3 = vector.load %arg4[%c0_3, %c0_4] : memref<32x3xf32, #tpu.memory_space<vmem>>, vector<32x1xf32>
    %4 = vector.broadcast %3 : vector<32x1xf32> to vector<32x2xf32>
    %5 = arith.addf %2, %4 : vector<32x2xf32>
    %cst_5 = arith.constant 0.000000e+00 : f32
    %6 = vector.broadcast %cst_5 : f32 to vector<32x2xf32>
    %7 = arith.maximumf %5, %6 : vector<32x2xf32>
    %c0_6 = arith.constant 0 : index
    %c0_7 = arith.constant 0 : index
    %8 = vector.load %arg3[%c0_6, %c0_7] : memref<32x32xf32, #tpu.memory_space<vmem>>, vector<32x32xf32>
    %cst_8 = arith.constant dense<0.000000e+00> : vector<32x2xf32>
    %9 = tpu.matmul %8, %7, %cst_8 {dimension_numbers = #tpu.dot_dimension_numbers<[1], [0], [0], [1], [0, 0, 1, 1], [], []>} : vector<32x32xf32>, vector<32x2xf32>, vector<32x2xf32> -> vector<32x2xf32>
    %c0_9 = arith.constant 0 : index
    %c1 = arith.constant 1 : index
    %10 = vector.load %arg4[%c0_9, %c1] : memref<32x3xf32, #tpu.memory_space<vmem>>, vector<32x1xf32>
    %11 = vector.broadcast %10 : vector<32x1xf32> to vector<32x2xf32>
    %12 = arith.addf %9, %11 : vector<32x2xf32>
    %cst_10 = arith.constant 0.000000e+00 : f32
    %13 = vector.broadcast %cst_10 : f32 to vector<32x2xf32>
    %14 = arith.maximumf %12, %13 : vector<32x2xf32>
    %c0_11 = arith.constant 0 : index
    %c2 = arith.constant 2 : index
    %15 = vector.load %arg4[%c0_11, %c2] : memref<32x3xf32, #tpu.memory_space<vmem>>, vector<32x1xf32>
    %16 = vector.broadcast %15 : vector<32x1xf32> to vector<32x2xf32>
    %17 = arith.mulf %14, %16 : vector<32x2xf32>
    %cst_12 = arith.constant dense<0.000000e+00> : vector<2xf32>
    %18 = vector.multi_reduction <add>, %17, %cst_12 [0] : vector<32x2xf32> to vector<2xf32>
    %19 = vector.shape_cast %18 : vector<2xf32> to vector<1x2xf32>
    %c0_13 = arith.constant 0 : index
    %c0_14 = arith.constant 0 : index
    %20 = memref.load %arg5[%c0_13, %c0_14] : memref<1x1xf32, #tpu.memory_space<smem>>
    %21 = vector.broadcast %20 : f32 to vector<1x2xf32>
    %22 = arith.addf %19, %21 : vector<1x2xf32>
    %c0_15 = arith.constant 0 : index
    %c0_16 = arith.constant 0 : index
    %23 = vector.load %arg6[%c0_15, %c0_16] : memref<1x2xf32, #tpu.memory_space<vmem>>, vector<1x2xf32>
    tpu.vector_store %arg6[%c0_15, %c0_16], %22 {strides = array<i32>} : memref<1x2xf32, #tpu.memory_space<vmem>>, vector<1x2xf32>,
    return
  }
  func.func @transform_0(%arg0: i32) -> (i32, i32) {
    %c0_i32 = arith.constant 0 : i32
    %c0_i32_0 = arith.constant 0 : i32
    return %c0_i32, %arg0 : i32, i32
  }
  func.func @transform_1(%arg0: i32) -> (i32, i32) {
    %c0_i32 = arith.constant 0 : i32
    %c0_i32_0 = arith.constant 0 : i32
    %c0_i32_1 = arith.constant 0 : i32
    return %c0_i32, %c0_i32_0 : i32, i32
  }
  func.func @transform_2(%arg0: i32) -> (i32, i32) {
    %c0_i32 = arith.constant 0 : i32
    %c0_i32_0 = arith.constant 0 : i32
    %c0_i32_1 = arith.constant 0 : i32
    return %c0_i32, %c0_i32_0 : i32, i32
  }
  func.func @transform_3(%arg0: i32) -> (i32, i32) {
    %c0_i32 = arith.constant 0 : i32
    %c0_i32_0 = arith.constant 0 : i32
    %c0_i32_1 = arith.constant 0 : i32
    return %c0_i32, %c0_i32_0 : i32, i32
  }
  func.func @transform_4(%arg0: i32) -> (i32, i32) {
    %c0_i32 = arith.constant 0 : i32
    %c0_i32_0 = arith.constant 0 : i32
    %c0_i32_1 = arith.constant 0 : i32
    return %c0_i32, %c0_i32_0 : i32, i32
  }
  func.func @transform_5(%arg0: i32) -> (i32, i32) {
    %c0_i32 = arith.constant 0 : i32
    %c0_i32_0 = arith.constant 0 : i32
    return %c0_i32, %arg0 : i32, i32
  }
}

</mosaic_0001>

<llo_original>
// kernel: tpu_custom_call.1
$region0: #{tpu_custom_call.1}
  #allocation0 [shape = 'u32[]', space=smem, size = 0x4, offset = 0x4, fixed_abs, tag = 'smem constant byte address 0x4 - core index']
  #allocation1 [shape = 'u32[144,128]{1,0:T(1,128)}', space=vmem, size = 0x12000, scoped, tag = 'internal scratch']
  #allocation2 [shape = 'f32[1,1]{1,0:T(1,128)S(6)}', space=smem, size = 0x200, scoped, tag = 'scoped memory for tpu_custom_call.1']
  %s0 = inlined_call_operand.vmem [shape: f32[8,2], index: 0, kind: input, shape index: {}]
  %s1 = inlined_call_operand.vmem [shape: f32[32,8], index: 1, kind: input, shape index: {}]
  %s2 = inlined_call_operand.vmem [shape: f32[32,32], index: 2, kind: input, shape index: {}]
  %s3 = inlined_call_operand.vmem [shape: f32[32,3], index: 3, kind: input, shape index: {}]
  %s4 = inlined_call_operand.<no memory space> [shape: f32[1,1], index: 4, kind: input, shape index: {}]
  %s5 = inlined_call_operand.hbm [shape: f32[1,2], index: 5, kind: output, shape index: {}]
  %s6 = sld [smem:[#allocation0]]
  $region30: #{tpu_custom_call.1} parent=0
    _
  %s8 = ssub.s32 1, %s6
  %s9 = scalar_select 0, %s8, %s6
  %10 = sst [smem:[#allocation2]] %s4
  $region1: #{tpu_custom_call.1} parent=0
    #allocation3 [shape = 'u8[512]{0}', space=vmem, size = 0x400, scoped, tag = 'output window, operand 0, single buffered']
    #allocation4 [shape = 's32[1]{0}', space=sflag, size = 0x4, scoped, tag = 'scoped memory for tpu_custom_call.1']
    %11 = vsyncpa [#allocation4], 0
    // Predicated region
    $region2: #{tpu_custom_call.1} parent=1 // pred_check
      _
    $region3: #{tpu_custom_call.1} parent=1 // pred_check_branch
      %13 = sbr.rel (0) target = $region5
    $region4: #{tpu_custom_call.1} parent=1 // pred_region
      _
    $region5: #{tpu_custom_call.1} parent=1 // pred_fallthru
      _
    // Predicated region
    $region6: #{tpu_custom_call.1} parent=1 // pred_check
      _
    $region7: #{tpu_custom_call.1} parent=1 // pred_check_branch
      %15 = sbr.rel (0) target = $region9
    $region8: #{tpu_custom_call.1} parent=1 // pred_region
      _
    $region9: #{tpu_custom_call.1} parent=1 // pred_fallthru
      _
    // Predicated region
    $region10: #{tpu_custom_call.1} parent=1 // pred_check
      _
    $region11: #{tpu_custom_call.1} parent=1 // pred_check_branch
      %17 = sbr.rel (0) target = $region13
    $region12: #{tpu_custom_call.1} parent=1 // pred_region
      _
    $region13: #{tpu_custom_call.1} parent=1 // pred_fallthru
      _
    // Predicated region
    $region14: #{tpu_custom_call.1} parent=1 // pred_check
      _
    $region15: #{tpu_custom_call.1} parent=1 // pred_check_branch
      %19 = sbr.rel (0) target = $region17
    $region16: #{tpu_custom_call.1} parent=1 // pred_region
      _
    $region17: #{tpu_custom_call.1} parent=1 // pred_fallthru
      _
    // Predicated region
    $region18: #{tpu_custom_call.1} parent=1 // pred_check
      _
    $region19: #{tpu_custom_call.1} parent=1 // pred_check_branch
      %21 = sbr.rel (0) target = $region21
    $region20: #{tpu_custom_call.1} parent=1 // pred_region
      _
    $region21: #{tpu_custom_call.1} parent=1 // pred_fallthru
      _
    %v22 = vld [vmem:[%s1] sm:$0xff]
    %v23 = vld [vmem:[%s1 + $0x8] sm:$0xff]
    %v24 = vld [vmem:[%s1 + $0x10] sm:$0xff]
    %v25 = vld [vmem:[%s1 + $0x18] sm:$0xff]
    %v26 = vld [vmem:[%s0] sm:$0xff]
    %v27 = vld [vmem:[%s3] sm:$0xff]
    %v28 = vld [vmem:[%s3 + $0x8] sm:$0xff]
    %v29 = vld [vmem:[%s3 + $0x10] sm:$0xff]
    %v30 = vld [vmem:[%s3 + $0x18] sm:$0xff]
    %32 = vset.pattern.permute.xlu0 0
    %33 = vperm.xlu0 %32, %v27
    %v34 = vpop.permute.xlu0 %33
    %37 = vset.pattern.permute.xlu0 0
    %38 = vperm.xlu0 %37, %v28
    %v39 = vpop.permute.xlu0 %38
    %42 = vset.pattern.permute.xlu0 0
    %43 = vperm.xlu0 %42, %v29
    %v44 = vpop.permute.xlu0 %43
    %47 = vset.pattern.permute.xlu0 0
    %48 = vperm.xlu0 %47, %v30
    %v49 = vpop.permute.xlu0 %48
    %vm51 = vcmask 64512
    %v53 = vsel %vm51, %v22, 0
    %v56 = vsel %vm51, %v23, 0
    %v59 = vsel %vm51, %v24, 0
    %v62 = vsel %vm51, %v25, 0
    %64 = vmatprep.subr.mxu0 0.0
    %65 = vmatpush1.msra.mxu0 %v26
    %66 = vmatprep.subr.mxu0 0.0
    %67 = vmatpush1.msra.mxu0 0.0
    %68 = vmatprep.subr.mxu0 0.0
    %69 = vmatpush1.msra.mxu0 0.0
    %70 = vmatprep.subr.mxu0 0.0
    %71 = vmatpush1.msra.mxu0 0.0
    %72 = vmatprep.subr.mxu0 0.0
    %73 = vmatpush1.msra.mxu0 0.0
    %74 = vmatprep.subr.mxu0 0.0
    %75 = vmatpush1.msra.mxu0 0.0
    %76 = vmatprep.subr.mxu0 0.0
    %77 = vmatpush1.msra.mxu0 0.0
    %78 = vmatprep.subr.mxu0 0.0
    %79 = vmatpush1.msra.mxu0 0.0
    %80 = vmatprep.subr.mxu0 0.0
    %81 = vmatpush1.msra.mxu0 0.0
    %82 = vmatprep.subr.mxu0 0.0
    %83 = vmatpush1.msra.mxu0 0.0
    %84 = vmatprep.subr.mxu0 0.0
    %85 = vmatpush1.msra.mxu0 0.0
    %86 = vmatprep.subr.mxu0 0.0
    %87 = vmatpush1.msra.mxu0 0.0
    %88 = vmatprep.subr.mxu0 0.0
    %89 = vmatpush1.msra.mxu0 0.0
    %90 = vmatprep.subr.mxu0 0.0
    %91 = vmatpush1.msra.mxu0 0.0
    %92 = vmatprep.subr.mxu0 0.0
    %93 = vmatpush1.msra.mxu0 0.0
    %94 = vmatprep.subr.mxu0 0.0
    %95 = vmatpush1.msra.mxu0 0.0
    %96 = vmatprep.subr.mxu0 0.0
    %97 = vmatpush1.msra.mxu0 0.0
    %98 = vmatprep.subr.mxu0 0.0
    %99 = vmatpush1.msra.mxu0 0.0
    %100 = vmatprep.subr.mxu0 0.0
    %101 = vmatpush1.msra.mxu0 0.0
    %102 = vmatprep.subr.mxu0 0.0
    %103 = vmatpush1.msra.mxu0 0.0
    %104 = vmatprep.subr.mxu0 0.0
    %105 = vmatpush1.msra.mxu0 0.0
    %106 = vmatprep.subr.mxu0 0.0
    %107 = vmatpush1.msra.mxu0 0.0
    %108 = vmatprep.subr.mxu0 0.0
    %109 = vmatpush1.msra.mxu0 0.0
    %110 = vmatprep.subr.mxu0 0.0
    %111 = vmatpush1.msra.mxu0 0.0
    %112 = vmatprep.subr.mxu0 0.0
    %113 = vmatpush1.msra.mxu0 0.0
    %114 = vmatprep.subr.mxu0 0.0
    %115 = vmatpush1.msra.mxu0 0.0
    %116 = vmatprep.subr.mxu0 0.0
    %117 = vmatpush1.msra.mxu0 0.0
    %118 = vmatprep.subr.mxu0 0.0
    %119 = vmatpush1.msra.mxu0 0.0
    %120 = vmatprep.subr.mxu0 0.0
    %121 = vmatpush1.msra.mxu0 0.0
    %122 = vmatprep.subr.mxu0 0.0
    %123 = vmatpush1.msra.mxu0 0.0
    %124 = vmatprep.subr.mxu0 0.0
    %125 = vmatpush1.msra.mxu0 0.0
    %126 = vmatprep.subr.mxu0 0.0
    %127 = vmatpush1.msra.mxu0 0.0
    %128 = vmatprep.mubr.f32.mxu0 0.0
    %129 = vmatmul.mubr.f32.gmra.mrb[0].mxu0 %v53
    %v130 = vpop.f32.mrb[0].mxu0
    %v131 = vadd.f32 %v34, %v130
    %v132 = vpop.f32.mrb[0].mxu0
    %133 = vmatprep.mubr.f32.mxu0 0.0
    %134 = vmatmul.mubr.f32.gmra.mrb[0].mxu0 %v56
    %v135 = vpop.f32.mrb[0].mxu0
    %v136 = vadd.f32 %v39, %v135
    %v137 = vpop.f32.mrb[0].mxu0
    %138 = vmatprep.mubr.f32.mxu0 0.0
    %139 = vmatmul.mubr.f32.gmra.mrb[0].mxu0 %v59
    %v140 = vpop.f32.mrb[0].mxu0
    %v141 = vadd.f32 %v44, %v140
    %v142 = vpop.f32.mrb[0].mxu0
    %143 = vmatprep.mubr.f32.mxu0 0.0
    %144 = vmatmul.mubr.f32.gmra.mrb[0].mxu0 %v62
    %v145 = vpop.f32.mrb[0].mxu0
    %v146 = vadd.f32 %v49, %v145
    %v147 = vpop.f32.mrb[0].mxu0
    %148 = vdwg.mxu0
    %v149 = vmax.f32 %v131, 0.0
    %v150 = vmax.f32 %v136, 0.0
    %v151 = vmax.f32 %v141, 0.0
    %v152 = vmax.f32 %v146, 0.0
    %v153 = vld [vmem:[%s2] sm:$0xff]
    %v154 = vld [vmem:[%s2 + $0x8] sm:$0xff]
    %v155 = vld [vmem:[%s2 + $0x10] sm:$0xff]
    %v156 = vld [vmem:[%s2 + $0x18] sm:$0xff]
    %157 = vset.pattern.permute.xlu0 1
    %158 = vperm.xlu0 %157, %v27
    %v159 = vpop.permute.xlu0 %158
    %161 = vset.pattern.permute.xlu0 1
    %162 = vperm.xlu0 %161, %v28
    %v163 = vpop.permute.xlu0 %162
    %165 = vset.pattern.permute.xlu0 1
    %166 = vperm.xlu0 %165, %v29
    %v167 = vpop.permute.xlu0 %166
    %169 = vset.pattern.permute.xlu0 1
    %170 = vperm.xlu0 %169, %v30
    %v171 = vpop.permute.xlu0 %170
    %vm173 = vcmask 261120
    %v175 = vsel %vm173, %v153, 0
    %v178 = vsel %vm173, %v154, 0
    %v181 = vsel %vm173, %v155, 0
    %v184 = vsel %vm173, %v156, 0
    %186 = vmatprep.subr.mxu0 0.0
    %187 = vmatpush1.msra.mxu0 %v149
    %188 = vmatprep.subr.mxu0 0.0
    %189 = vmatpush1.msra.mxu0 %v150
    %190 = vmatprep.subr.mxu0 0.0
    %191 = vmatpush1.msra.mxu0 %v151
    %192 = vmatprep.subr.mxu0 0.0
    %193 = vmatpush1.msra.mxu0 %v152
    %194 = vmatprep.subr.mxu0 0.0
    %195 = vmatpush1.msra.mxu0 0.0
    %196 = vmatprep.subr.mxu0 0.0
    %197 = vmatpush1.msra.mxu0 0.0
    %198 = vmatprep.subr.mxu0 0.0
    %199 = vmatpush1.msra.mxu0 0.0
    %200 = vmatprep.subr.mxu0 0.0
    %201 = vmatpush1.msra.mxu0 0.0
    %202 = vmatprep.subr.mxu0 0.0
    %203 = vmatpush1.msra.mxu0 0.0
    %204 = vmatprep.subr.mxu0 0.0
    %205 = vmatpush1.msra.mxu0 0.0
    %206 = vmatprep.subr.mxu0 0.0
    %207 = vmatpush1.msra.mxu0 0.0
    %208 = vmatprep.subr.mxu0 0.0
    %209 = vmatpush1.msra.mxu0 0.0
    %210 = vmatprep.subr.mxu0 0.0
    %211 = vmatpush1.msra.mxu0 0.0
    %212 = vmatprep.subr.mxu0 0.0
    %213 = vmatpush1.msra.mxu0 0.0
    %214 = vmatprep.subr.mxu0 0.0
    %215 = vmatpush1.msra.mxu0 0.0
    %216 = vmatprep.subr.mxu0 0.0
    %217 = vmatpush1.msra.mxu0 0.0
    %218 = vmatprep.subr.mxu0 0.0
    %219 = vmatpush1.msra.mxu0 0.0
    %220 = vmatprep.subr.mxu0 0.0
    %221 = vmatpush1.msra.mxu0 0.0
    %222 = vmatprep.subr.mxu0 0.0
    %223 = vmatpush1.msra.mxu0 0.0
    %224 = vmatprep.subr.mxu0 0.0
    %225 = vmatpush1.msra.mxu0 0.0
    %226 = vmatprep.subr.mxu0 0.0
    %227 = vmatpush1.msra.mxu0 0.0
    %228 = vmatprep.subr.mxu0 0.0
    %229 = vmatpush1.msra.mxu0 0.0
    %230 = vmatprep.subr.mxu0 0.0
    %231 = vmatpush1.msra.mxu0 0.0
    %232 = vmatprep.subr.mxu0 0.0
    %233 = vmatpush1.msra.mxu0 0.0
    %234 = vmatprep.subr.mxu0 0.0
    %235 = vmatpush1.msra.mxu0 0.0
    %236 = vmatprep.subr.mxu0 0.0
    %237 = vmatpush1.msra.mxu0 0.0
    %238 = vmatprep.subr.mxu0 0.0
    %239 = vmatpush1.msra.mxu0 0.0
    %240 = vmatprep.subr.mxu0 0.0
    %241 = vmatpush1.msra.mxu0 0.0
    %242 = vmatprep.subr.mxu0 0.0
    %243 = vmatpush1.msra.mxu0 0.0
    %244 = vmatprep.subr.mxu0 0.0
    %245 = vmatpush1.msra.mxu0 0.0
    %246 = vmatprep.subr.mxu0 0.0
    %247 = vmatpush1.msra.mxu0 0.0
    %248 = vmatprep.subr.mxu0 0.0
    %249 = vmatpush1.msra.mxu0 0.0
    %250 = vmatprep.mubr.f32.mxu0 0.0
    %251 = vmatmul.mubr.f32.gmra.mrb[0].mxu0 %v175
    %v252 = vpop.f32.mrb[0].mxu0
    %v253 = vadd.f32 %v159, %v252
    %v254 = vpop.f32.mrb[0].mxu0
    %255 = vmatprep.mubr.f32.mxu0 0.0
    %256 = vmatmul.mubr.f32.gmra.mrb[0].mxu0 %v178
    %v257 = vpop.f32.mrb[0].mxu0
    %v258 = vadd.f32 %v163, %v257
    %v259 = vpop.f32.mrb[0].mxu0
    %260 = vmatprep.mubr.f32.mxu0 0.0
    %261 = vmatmul.mubr.f32.gmra.mrb[0].mxu0 %v181
    %v262 = vpop.f32.mrb[0].mxu0
    %v263 = vadd.f32 %v167, %v262
    %v264 = vpop.f32.mrb[0].mxu0
    %265 = vmatprep.mubr.f32.mxu0 0.0
    %266 = vmatmul.mubr.f32.gmra.mrb[0].mxu0 %v184
    %v267 = vpop.f32.mrb[0].mxu0
    %v268 = vadd.f32 %v171, %v267
    %v269 = vpop.f32.mrb[0].mxu0
    %270 = vdwg.mxu0
    %v271 = vmax.f32 %v253, 0.0
    %v272 = vmax.f32 %v258, 0.0
    %v273 = vmax.f32 %v263, 0.0
    %v274 = vmax.f32 %v268, 0.0
    %275 = vset.pattern.permute.xlu0 2
    %276 = vperm.xlu0 %275, %v27
    %v277 = vpop.permute.xlu0 %276
    %279 = vset.pattern.permute.xlu0 2
    %280 = vperm.xlu0 %279, %v28
    %v281 = vpop.permute.xlu0 %280
    %283 = vset.pattern.permute.xlu0 2
    %284 = vperm.xlu0 %283, %v29
    %v285 = vpop.permute.xlu0 %284
    %287 = vset.pattern.permute.xlu0 2
    %288 = vperm.xlu0 %287, %v30
    %v289 = vpop.permute.xlu0 %288
    %v291 = vmul.f32 %v271, %v277
    %v292 = vmul.f32 %v272, %v281
    %v293 = vmul.f32 %v273, %v285
    %v294 = vmul.f32 %v274, %v289
    %vm295 = vcmask 15360
    %v296 = vsel %vm295, %v291, 0.0
    %v297 = vsel %vm295, %v292, 0.0
    %v298 = vadd.f32 %v296, %v297
    %v299 = vsel %vm295, %v293, 0.0
    %v300 = vadd.f32 %v298, %v299
    %v301 = vsel %vm295, %v294, 0.0
    %v302 = vadd.f32 %v300, %v301
    %v303 = vrot.slane %v302, 4
    %v304 = vadd.f32 %v302, %v303
    %v305 = vrot.slane %v304, 2
    %v306 = vadd.f32 %v304, %v305
    %v307 = vrot.slane %v306, 1
    %v308 = vadd.f32 %v306, %v307
    %s309 = sld [smem:[#allocation2]]
    %v310 = vstv %s309
    %v311 = vadd.f32 %v308, %v310
    %vm312 = vcmask 8192
    %313 = vst.msk [vmem:[#allocation3] sm:$0x1] %vm312, %v311
    // Predicated region
    $region22: #{tpu_custom_call.1} parent=1 // pred_check
      _
    $region23: #{tpu_custom_call.1} parent=1 // pred_check_branch
      %315 = sbr.rel (0) target = $region25
    $region24: #{tpu_custom_call.1} parent=1 // pred_region
      %s317 = ssub.s32 16, 16
      %318 = vsyncadd [#allocation4], %s317
      %s320 = sshll.u32 [#allocation3], 4
      %s321 = int_to_ptr.vmem [resolvable:$true] %s320
      %323 = dma.vmem_to_hbm [thread:$0]  %s321, 16, %s5, [#allocation4]
    $region25: #{tpu_custom_call.1} parent=1 // pred_fallthru
      _
    // Predicated region
    $region26: #{tpu_custom_call.1} parent=1 // pred_check
      _
    $region27: #{tpu_custom_call.1} parent=1 // pred_check_branch
      %325 = sbr.rel (0) target = $region29
    $region28: #{tpu_custom_call.1} parent=1 // pred_region
      %326 = dma.done [#allocation4], 16
    $region29: #{tpu_custom_call.1} parent=1 // pred_fallthru
      _
    %327 = vsyncpa [#allocation4], 1

</llo_original>
